<compile_context>
chip_gen: v6e
topology: v6e:2x2x1
jax: 0.10.0
libtpu: 0.0.40
codegen_flags: <defaults>
</compile_context>

<pallas_src>
import jax
import jax.numpy as jnp
from jax.experimental import pallas as pl
from jax.experimental.pallas import tpu as pltpu


def _copy_kernel(x_ref, o_ref):
    # Identity on the data path (abstract base class defines no transform).
    o_ref[...] = x_ref[...]


def _sublane_multiple(dtype):
    """Row-tile multiple to keep sub-32-bit dtypes packed without repacking."""
    itemsize = jnp.dtype(dtype).itemsize
    if itemsize == 1:
        return 32
    if itemsize == 2:
        return 16
    return 8


def model_forward(x):
    """Pallas equivalent of `_Model.forward(x)` / `_Model.test(x)`.

    Returns an array identical in shape/dtype/value, routed through a
    tiled, pipelined Pallas TPU copy kernel.
    """
    orig_shape = x.shape
    dtype = x.dtype
    itemsize = jnp.dtype(dtype).itemsize
    total = int(x.size)
    sub = _sublane_multiple(dtype)

    # --- Lane-dense 2-D slab layout -------------------------------------
    # Wide (1024) lanes when there is enough data; 128 lanes otherwise.
    cols = 1024 if total >= 1024 * sub else 128

    # Row-block size: target ~2 MiB per block (4 live blocks ≈ 8 MiB VMEM,
    # safe under v5e's 16 MiB / v7x's 32 MiB default scoped VMEM).
    target_block_bytes = 2 * 1024 * 1024
    tm = max(sub, ((target_block_bytes // (cols * itemsize)) // sub) * sub)
    rows_needed = pl.cdiv(total, cols)
    rows_needed = pl.cdiv(rows_needed, sub) * sub
    tm = min(tm, rows_needed)

    # Pad flat size so the grid tiles evenly (no remainder blocks).
    padded_total = pl.cdiv(total, tm * cols) * (tm * cols)
    rows = padded_total // cols
    grid = rows // tm

    x_flat = x.reshape(-1)
    if padded_total != total:
        x_flat = jnp.pad(x_flat, (0, padded_total - total))
    x2d = x_flat.reshape(rows, cols)

    block_bytes = tm * cols * itemsize
    # Enough for double-buffered in + out blocks with headroom; fits every
    # generation (<= 64 MiB physical on v7x).
    vmem_limit = min(64 * 1024 * 1024, max(8 * block_bytes, 4 * 1024 * 1024))

    out2d = pl.pallas_call(
        _copy_kernel,
        out_shape=jax.ShapeDtypeStruct((rows, cols), dtype),
        grid_spec=pltpu.PrefetchScalarGridSpec(
            num_scalar_prefetch=0,
            grid=(grid,),
            in_specs=[pl.BlockSpec((tm, cols), lambda i: (i, 0))],
            out_specs=pl.BlockSpec((tm, cols), lambda i: (i, 0)),
        ),
        compiler_params=pltpu.CompilerParams(
            dimension_semantics=("parallel",),
            vmem_limit_bytes=vmem_limit,
        ),
        input_output_aliases={0: 0},
        cost_estimate=pl.CostEstimate(
            flops=0,
            transcendentals=0,
            bytes_accessed=2 * padded_total * itemsize,
        ),
    )(x2d)

    out_flat = out2d.reshape(-1)
    if padded_total != total:
        out_flat = out_flat[:total]
    return out_flat.reshape(orig_shape)


def model_test(x, target=None):
    """Mirrors `_Model.test`: inference-mode call of forward."""
    return model_forward(x)


if __name__ == "__main__":
    key = jax.random.PRNGKey(0)
    # Small NCHW input consistent with the module's conv-style usage.
    x = jax.random.normal(key, (2, 4, 16, 16), dtype=jnp.float32)

    y = model_test(x)
    y = jax.block_until_ready(y)

    # Sanity: identity semantics (no defined transform in the base class).
    assert y.shape == x.shape and y.dtype == x.dtype
    assert bool(jnp.allclose(y, x))

    # Also exercise a shape whose H*W is NOT a multiple of 128 (7x7 maps)
    # to verify the robust lane-dense padding path.
    x2 = jax.random.normal(jax.random.PRNGKey(1), (2, 4, 7, 7), dtype=jnp.float32)
    y2 = jax.block_until_ready(model_test(x2))
    assert y2.shape == x2.shape and bool(jnp.allclose(y2, x2))

    print("KERNEL_OK")
</pallas_src>

<mosaic_0001>
module attributes {stable_mosaic.version = 11 : i64} {
  func.func @_copy_kernel(%arg0: i32, %arg1: memref<16x128xf32, #tpu.memory_space<vmem>>, %arg2: memref<16x128xf32, #tpu.memory_space<vmem>>) attributes {dimension_semantics = [#tpu.dimension_semantics<parallel>], iteration_bounds = array<i64: 1>, scalar_prefetch = 0 : i64, scratch_operands = 0 : i64, tpu.core_type = #tpu.core_type<tc>, window_params = [{transform_indices = @transform_0, window_bounds = array<i64: 16, 128>}, {transform_indices = @transform_1, window_bounds = array<i64: 16, 128>}]} {
    %c0 = arith.constant 0 : index
    %c0_0 = arith.constant 0 : index
    %0 = vector.load %arg1[%c0, %c0_0] : memref<16x128xf32, #tpu.memory_space<vmem>>, vector<16x128xf32>
    %c0_1 = arith.constant 0 : index
    %c0_2 = arith.constant 0 : index
    %1 = vector.load %arg2[%c0_1, %c0_2] : memref<16x128xf32, #tpu.memory_space<vmem>>, vector<16x128xf32>
    tpu.vector_store %arg2[%c0_1, %c0_2], %0 {strides = array<i32>} : memref<16x128xf32, #tpu.memory_space<vmem>>, vector<16x128xf32>,
    return
  }
  func.func @transform_0(%arg0: i32) -> (i32, i32) {
    %c0_i32 = arith.constant 0 : i32
    %c0_i32_0 = arith.constant 0 : i32
    return %arg0, %c0_i32 : i32, i32
  }
  func.func @transform_1(%arg0: i32) -> (i32, i32) {
    %c0_i32 = arith.constant 0 : i32
    %c0_i32_0 = arith.constant 0 : i32
    return %arg0, %c0_i32 : i32, i32
  }
}

</mosaic_0001>

<llo_original>
// kernel: tpu_custom_call.1
$region0: #{tpu_custom_call.1}
  #allocation0 [shape = 'u32[]', space=smem, size = 0x4, offset = 0x4, fixed_abs, tag = 'smem constant byte address 0x4 - core index']
  #allocation1 [shape = 'u32[144,128]{1,0:T(1,128)}', space=vmem, size = 0x12000, scoped, tag = 'internal scratch']
  %s0 = inlined_call_operand.hbm [shape: f32[16,128], index: 0, kind: input, shape index: {}, may-alias: {0,1}]
  %s1 = inlined_call_operand.hbm [shape: f32[16,128], index: 1, kind: output, shape index: {}, may-alias: {0,1}]
  %s2 = sld [smem:[#allocation0]]
  $region18: #{tpu_custom_call.1} parent=0
    _
  %s4 = ssub.s32 1, %s2
  %s5 = scalar_select 0, %s4, %s2
  $region1: #{tpu_custom_call.1} parent=0
    #allocation2 [shape = 'u8[8192]{0}', space=vmem, size = 0x2000, scoped, tag = 'input window, operand 0, single buffered']
    #allocation3 [shape = 's32[1]{0}', space=sflag, size = 0x4, scoped, tag = 'scoped memory for tpu_custom_call.1']
    #allocation4 [shape = 's32[1]{0}', space=sflag, size = 0x4, scoped, tag = 'scoped memory for tpu_custom_call.1']
    #allocation5 [shape = 'u8[8192]{0}', space=vmem, size = 0x2000, scoped, tag = 'output window, operand 0, single buffered']
    %6 = vsyncpa [#allocation3], 0
    %7 = vsyncpa [#allocation4], 0
    // Predicated region
    $region2: #{tpu_custom_call.1} parent=1 // pred_check
      _
    $region3: #{tpu_custom_call.1} parent=1 // pred_check_branch
      %9 = sbr.rel (0) target = $region5
    $region4: #{tpu_custom_call.1} parent=1 // pred_region
      %s11 = ssub.s32 256, 256
      %12 = vsyncadd [#allocation3], %s11
      %s13 = sshll.u32 [#allocation2], 4
      %s14 = int_to_ptr.vmem [resolvable:$true] %s13
      %19 = dma.hbm_to_vmem [thread:$0]  %s0, 256, %s14, [#allocation3], 128, 128, 8
    $region5: #{tpu_custom_call.1} parent=1 // pred_fallthru
      _
    // Predicated region
    $region6: #{tpu_custom_call.1} parent=1 // pred_check
      _
    $region7: #{tpu_custom_call.1} parent=1 // pred_check_branch
      %21 = sbr.rel (0) target = $region9
    $region8: #{tpu_custom_call.1} parent=1 // pred_region
      %22 = dma.done [#allocation3], 256
    $region9: #{tpu_custom_call.1} parent=1 // pred_fallthru
      _
    %v23 = vld [vmem:[#allocation2] sm:$0xff]
    %v24 = vld [vmem:[#allocation2 + $0x8] sm:$0xff]
    %25 = vst [vmem:[#allocation5] sm:$0xff] %v23
    %26 = vst [vmem:[#allocation5 + $0x8] sm:$0xff] %v24
    // Predicated region
    $region10: #{tpu_custom_call.1} parent=1 // pred_check
      _
    $region11: #{tpu_custom_call.1} parent=1 // pred_check_branch
      %28 = sbr.rel (0) target = $region13
    $region12: #{tpu_custom_call.1} parent=1 // pred_region
      %s30 = ssub.s32 256, 256
      %31 = vsyncadd [#allocation4], %s30
      %s32 = sshll.u32 [#allocation5], 4
      %s33 = int_to_ptr.vmem [resolvable:$true] %s32
      %38 = dma.vmem_to_hbm [thread:$0]  %s33, 256, %s1, [#allocation4], 128, 128, 8
    $region13: #{tpu_custom_call.1} parent=1 // pred_fallthru
      _
    // Predicated region
    $region14: #{tpu_custom_call.1} parent=1 // pred_check
      _
    $region15: #{tpu_custom_call.1} parent=1 // pred_check_branch
      %40 = sbr.rel (0) target = $region17
    $region16: #{tpu_custom_call.1} parent=1 // pred_region
      %41 = dma.done [#allocation4], 256
    $region17: #{tpu_custom_call.1} parent=1 // pred_fallthru
      _
    %42 = vsyncpa [#allocation3], 1
    %43 = vsyncpa [#allocation4], 1

</llo_original>
